<compile_context>
chip_gen: v6e
topology: v6e:2x2x1
jax: 0.10.0
libtpu: 0.0.40
codegen_flags: <defaults>
</compile_context>

<pallas_src>
import functools
import math

import jax
import jax.numpy as jnp
from jax.experimental import pallas as pl
from jax.experimental.pallas import tpu as pltpu


def _combination_kernel(x_ref, w_ref, b_ref, o_ref, acc_ref):
    # x_ref: (tm, tk)  w_ref: (tk, tn)  b_ref: (1, tn)  o_ref: (tm, tn)
    k = pl.program_id(2)

    @pl.when(k == 0)
    def _init():
        acc_ref[...] = jnp.zeros_like(acc_ref)

    acc_ref[...] += jnp.dot(x_ref[...], w_ref[...],
                            preferred_element_type=jnp.float32)

    @pl.when(k == pl.num_programs(2) - 1)
    def _finalize():
        out = acc_ref[...] + b_ref[...].astype(jnp.float32)
        o_ref[...] = jnp.maximum(out, 0.0).astype(o_ref.dtype)


def _round_up(x, n):
    return ((x + n - 1) // n) * n


def _pick_tk(in_ch, max_tk=512):
    """K tile: full K when small; otherwise a 128-aligned divisor of in_ch
    (a non-dividing tk would let partial-block garbage enter the accumulator)."""
    if in_ch <= max_tk:
        return in_ch
    for cand in (512, 256, 128):
        if in_ch % cand == 0:
            return cand
    return in_ch  # odd in_ch: keep full K (correct, just a bigger VMEM block)


@functools.partial(jax.jit, static_argnames=("tm", "tn", "tk"))
def combination_layer(x, weight, bias=None, *, tm=None, tn=None, tk=None):
    """Pallas equivalent of CombinationLayer.forward.

    x:      (..., in_ch)
    weight: (in_ch, out_ch)
    bias:   (out_ch,) or None
    returns (..., out_ch)
    """
    in_ch, out_ch = weight.shape
    lead_shape = x.shape[:-1]
    m = math.prod(lead_shape) if lead_shape else 1
    out_dtype = jnp.result_type(x.dtype, weight.dtype)

    # ---- lane-dense output: pad out_ch (weight + bias only) to 128 multiple.
    n_pad = _round_up(out_ch, 128)
    if n_pad != out_ch:
        weight = jnp.pad(weight, ((0, 0), (0, n_pad - out_ch)))
    if bias is None:
        b2d = jnp.zeros((1, n_pad), dtype=weight.dtype)
    else:
        if n_pad != out_ch:
            bias = jnp.pad(bias, (0, n_pad - out_ch))
        b2d = bias.reshape(1, n_pad)

    x2d = x.reshape(m, in_ch)

    # ---- tile selection ------------------------------------------------
    if tm is None:
        tm = 512                      # multiple of 8, good HBM-roofline size
    tm = m if m <= tm else tm
    if tn is None:
        tn = 512                      # multiple of 128
    tn = n_pad if n_pad <= tn else tn
    if tk is None:
        tk = _pick_tk(in_ch)

    grid = (pl.cdiv(m, tm), pl.cdiv(n_pad, tn), pl.cdiv(in_ch, tk))

    # ---- VMEM budget (double-buffered in/out + f32 accumulator) ---------
    x_isz = jnp.dtype(x2d.dtype).itemsize
    w_isz = jnp.dtype(weight.dtype).itemsize
    o_isz = jnp.dtype(out_dtype).itemsize
    vmem_est = (2 * tm * tk * x_isz
                + 2 * tk * tn * w_isz
                + 2 * tn * w_isz
                + 2 * tm * tn * o_isz
                + tm * tn * 4)
    vmem_limit = int(min(max(2 * vmem_est, 32 * 1024 * 1024),
                         64 * 1024 * 1024))   # stay valid on v7x (64 MiB VMEM)

    cost = pl.CostEstimate(
        flops=2 * m * in_ch * n_pad,
        transcendentals=0,
        bytes_accessed=(m * in_ch * x_isz + in_ch * n_pad * w_isz
                        + n_pad * w_isz + m * n_pad * o_isz))

    out2d = pl.pallas_call(
        _combination_kernel,
        out_shape=jax.ShapeDtypeStruct((m, n_pad), out_dtype),
        grid_spec=pltpu.PrefetchScalarGridSpec(
            num_scalar_prefetch=0,
            grid=grid,
            in_specs=[
                pl.BlockSpec((tm, tk), lambda i, j, k: (i, k)),   # x
                pl.BlockSpec((tk, tn), lambda i, j, k: (k, j)),   # weight
                pl.BlockSpec((1, tn), lambda i, j, k: (0, j)),    # bias row
            ],
            out_specs=pl.BlockSpec((tm, tn), lambda i, j, k: (i, j)),
            scratch_shapes=[pltpu.VMEM((tm, tn), jnp.float32)],
        ),
        compiler_params=pltpu.CompilerParams(
            dimension_semantics=("parallel", "parallel", "arbitrary"),
            vmem_limit_bytes=vmem_limit,
        ),
        cost_estimate=cost,
    )(x2d, weight, b2d)

    out2d = out2d[:, :out_ch]               # drop lane padding
    return out2d.reshape(lead_shape + (out_ch,))


def init_params(key, in_ch, out_ch, bias=True, dtype=jnp.float32):
    """Deterministic init mirroring CombinationLayer.reset_parameters:
    uniform(-stdv, stdv) with stdv = 1/sqrt(out_ch)."""
    stdv = 1.0 / (out_ch ** 0.5)
    kw, kb = jax.random.split(key)
    weight = jax.random.uniform(kw, (in_ch, out_ch), dtype=dtype,
                                minval=-stdv, maxval=stdv)
    b = None
    if bias:
        b = jax.random.uniform(kb, (out_ch,), dtype=dtype,
                               minval=-stdv, maxval=stdv)
    return weight, b


def _reference(x, weight, bias):
    out = jnp.matmul(x, weight, precision=jax.lax.Precision.HIGHEST)
    if bias is not None:
        out = out + bias
    return jnp.maximum(out, 0.0)


if __name__ == "__main__":
    key = jax.random.PRNGKey(0)
    k_x1, k_p1, k_x2, k_p2 = jax.random.split(key, 4)

    # --- small shapes matching the module's forward ----------------------
    batch, seq, in_ch, out_ch = 2, 8, 32, 64
    x = jax.random.normal(k_x1, (batch, seq, in_ch), dtype=jnp.float32)
    weight, bias = init_params(k_p1, in_ch, out_ch, bias=True)

    out = jax.block_until_ready(combination_layer(x, weight, bias))
    ref = _reference(x, weight, bias)
    assert out.shape == (batch, seq, out_ch)
    assert jnp.allclose(out, ref, atol=1e-4, rtol=1e-4)

    # --- a second check that exercises M / K tiling and the no-bias path --
    batch2, seq2, in_ch2, out_ch2 = 4, 300, 1024, 192
    x2 = jax.random.normal(k_x2, (batch2, seq2, in_ch2), dtype=jnp.float32)
    weight2, _ = init_params(k_p2, in_ch2, out_ch2, bias=False)

    out2 = jax.block_until_ready(combination_layer(x2, weight2, None))
    ref2 = _reference(x2, weight2, None)
    assert out2.shape == (batch2, seq2, out_ch2)
    assert jnp.allclose(out2, ref2, atol=1e-4, rtol=1e-4)

    print("KERNEL_OK")
</pallas_src>

<mosaic_0001>
module attributes {stable_mosaic.version = 11 : i64} {
  func.func @_combination_kernel(%arg0: i32, %arg1: i32, %arg2: i32, %arg3: memref<16x32xf32, #tpu.memory_space<vmem>>, %arg4: memref<32x128xf32, #tpu.memory_space<vmem>>, %arg5: memref<1x128xf32, #tpu.memory_space<vmem>>, %arg6: memref<16x128xf32, #tpu.memory_space<vmem>>, %arg7: memref<16x128xf32, #tpu.memory_space<vmem>>) attributes {dimension_semantics = [#tpu.dimension_semantics<parallel>, #tpu.dimension_semantics<parallel>, #tpu.dimension_semantics<arbitrary>], iteration_bounds = array<i64: 1, 1, 1>, scalar_prefetch = 0 : i64, scratch_operands = 1 : i64, tpu.core_type = #tpu.core_type<tc>, window_params = [{transform_indices = @transform_0, window_bounds = array<i64: 16, 32>}, {transform_indices = @transform_1, window_bounds = array<i64: 32, 128>}, {transform_indices = @transform_2, window_bounds = array<i64: 1, 128>}, {transform_indices = @transform_3, window_bounds = array<i64: 16, 128>}]} {
    %c0_i32 = arith.constant 0 : i32
    %0 = arith.cmpi eq, %arg2, %c0_i32 : i32
    %1 = arith.extui %0 : i1 to i32
    %c0_i32_0 = arith.constant 0 : i32
    %2 = arith.cmpi ne, %1, %c0_i32_0 : i32
    scf.if %2 {
      %cst_10 = arith.constant 0.000000e+00 : f32
      %12 = vector.broadcast %cst_10 : f32 to vector<16x128xf32>
      %c0_11 = arith.constant 0 : index
      %c0_12 = arith.constant 0 : index
      %13 = vector.load %arg7[%c0_11, %c0_12] : memref<16x128xf32, #tpu.memory_space<vmem>>, vector<16x128xf32>
      tpu.vector_store %arg7[%c0_11, %c0_12], %12 {strides = array<i32>} : memref<16x128xf32, #tpu.memory_space<vmem>>, vector<16x128xf32>,
    } else {
    }
    %c0 = arith.constant 0 : index
    %c0_1 = arith.constant 0 : index
    %3 = vector.load %arg7[%c0, %c0_1] : memref<16x128xf32, #tpu.memory_space<vmem>>, vector<16x128xf32>
    %c0_2 = arith.constant 0 : index
    %c0_3 = arith.constant 0 : index
    %4 = vector.load %arg3[%c0_2, %c0_3] : memref<16x32xf32, #tpu.memory_space<vmem>>, vector<16x32xf32>
    %c0_4 = arith.constant 0 : index
    %c0_5 = arith.constant 0 : index
    %5 = vector.load %arg4[%c0_4, %c0_5] : memref<32x128xf32, #tpu.memory_space<vmem>>, vector<32x128xf32>
    %cst = arith.constant dense<0.000000e+00> : vector<16x128xf32>
    %6 = tpu.matmul %4, %5, %cst {dimension_numbers = #tpu.dot_dimension_numbers<[1], [0], [0], [1], [0, 0, 1, 1], [], []>} : vector<16x32xf32>, vector<32x128xf32>, vector<16x128xf32> -> vector<16x128xf32>
    %7 = arith.addf %3, %6 : vector<16x128xf32>
    %c0_6 = arith.constant 0 : index
    %c0_7 = arith.constant 0 : index
    %8 = vector.load %arg7[%c0_6, %c0_7] : memref<16x128xf32, #tpu.memory_space<vmem>>, vector<16x128xf32>
    tpu.vector_store %arg7[%c0_6, %c0_7], %7 {strides = array<i32>} : memref<16x128xf32, #tpu.memory_space<vmem>>, vector<16x128xf32>,
    %c0_i32_8 = arith.constant 0 : i32
    %9 = arith.cmpi eq, %arg2, %c0_i32_8 : i32
    %10 = arith.extui %9 : i1 to i32
    %c0_i32_9 = arith.constant 0 : i32
    %11 = arith.cmpi ne, %10, %c0_i32_9 : i32
    scf.if %11 {
      %c0_10 = arith.constant 0 : index
      %c0_11 = arith.constant 0 : index
      %12 = vector.load %arg7[%c0_10, %c0_11] : memref<16x128xf32, #tpu.memory_space<vmem>>, vector<16x128xf32>
      %c0_12 = arith.constant 0 : index
      %c0_13 = arith.constant 0 : index
      %13 = vector.load %arg5[%c0_12, %c0_13] : memref<1x128xf32, #tpu.memory_space<vmem>>, vector<1x128xf32>
      %14 = vector.broadcast %13 : vector<1x128xf32> to vector<16x128xf32>
      %15 = arith.addf %12, %14 : vector<16x128xf32>
      %cst_14 = arith.constant 0.000000e+00 : f32
      %16 = vector.broadcast %cst_14 : f32 to vector<16x128xf32>
      %17 = arith.maximumf %15, %16 : vector<16x128xf32>
      %c0_15 = arith.constant 0 : index
      %c0_16 = arith.constant 0 : index
      %18 = vector.load %arg6[%c0_15, %c0_16] : memref<16x128xf32, #tpu.memory_space<vmem>>, vector<16x128xf32>
      tpu.vector_store %arg6[%c0_15, %c0_16], %17 {strides = array<i32>} : memref<16x128xf32, #tpu.memory_space<vmem>>, vector<16x128xf32>,
    } else {
    }
    return
  }
  func.func @transform_0(%arg0: i32, %arg1: i32, %arg2: i32) -> (i32, i32) {
    %c0_i32 = arith.constant 0 : i32
    return %arg0, %arg2 : i32, i32
  }
  func.func @transform_1(%arg0: i32, %arg1: i32, %arg2: i32) -> (i32, i32) {
    %c0_i32 = arith.constant 0 : i32
    return %arg2, %arg1 : i32, i32
  }
  func.func @transform_2(%arg0: i32, %arg1: i32, %arg2: i32) -> (i32, i32) {
    %c0_i32 = arith.constant 0 : i32
    %c0_i32_0 = arith.constant 0 : i32
    return %c0_i32, %arg1 : i32, i32
  }
  func.func @transform_3(%arg0: i32, %arg1: i32, %arg2: i32) -> (i32, i32) {
    %c0_i32 = arith.constant 0 : i32
    return %arg0, %arg1 : i32, i32
  }
}

</mosaic_0001>

<llo_original>
// kernel: combination_layer.1
$region0: #{combination_layer.1}
  #allocation0 [shape = 'u32[]', space=smem, size = 0x4, offset = 0x4, fixed_abs, tag = 'smem constant byte address 0x4 - core index']
  #allocation1 [shape = 'u32[144,128]{1,0:T(1,128)}', space=vmem, size = 0x12000, scoped, tag = 'internal scratch']
  #allocation2 [shape = 'f32[16,128]{1,0:T(8,128)}', space=vmem, size = 0x2000, scoped, tag = 'scratch operand']
  %s0 = inlined_call_operand.vmem [shape: f32[16,32], index: 0, kind: input, shape index: {}]
  %s1 = inlined_call_operand.vmem [shape: f32[32,128], index: 1, kind: input, shape index: {}]
  %s2 = inlined_call_operand.vmem [shape: f32[1,128], index: 2, kind: input, shape index: {}]
  %s3 = inlined_call_operand.vmem [shape: f32[16,128], index: 3, kind: output, shape index: {}]
  %s4 = sld [smem:[#allocation0]]
  $region30: #{combination_layer.1} parent=0
    _
  %s6 = ssub.s32 1, %s4
  %s7 = scalar_select 0, %s6, %s4
  // Predicated region
  $region2: #{combination_layer.1} parent=0 // pred_check
    _
  $region3: #{combination_layer.1} parent=0 // pred_check_branch
    %9 = sbr.rel (0) target = $region5
  $region4: #{combination_layer.1} parent=0 // pred_region
    _
  $region5: #{combination_layer.1} parent=0 // pred_fallthru
    _
  // Predicated region
  $region6: #{combination_layer.1} parent=0 // pred_check
    _
  $region7: #{combination_layer.1} parent=0 // pred_check_branch
    %11 = sbr.rel (0) target = $region9
  $region8: #{combination_layer.1} parent=0 // pred_region
    _
  $region9: #{combination_layer.1} parent=0 // pred_fallthru
    _
  // Predicated region
  $region10: #{combination_layer.1} parent=0 // pred_check
    _
  $region11: #{combination_layer.1} parent=0 // pred_check_branch
    %13 = sbr.rel (0) target = $region13
  $region12: #{combination_layer.1} parent=0 // pred_region
    _
  $region13: #{combination_layer.1} parent=0 // pred_fallthru
    _
  %p14 = scmp.eq.s32.totalorder 0, 0
  // Predicated region
  $region14: #{combination_layer.1} parent=0 // pred_check
    %p15 = pneg %p14
  $region15: #{combination_layer.1} parent=0 // pred_check_branch
    %17 = sbr.rel (%p15) target = $region17
  $region16: #{combination_layer.1} parent=0 // pred_region
    %18 = vst [vmem:[#allocation2] sm:$0xff] 0.0
    %19 = vst [vmem:[#allocation2 + $0x8] sm:$0xff] 0.0
  $region17: #{combination_layer.1} parent=0 // pred_fallthru
    _
  %v20 = vld [vmem:[#allocation2] sm:$0xff]
  %v21 = vld [vmem:[#allocation2 + $0x8] sm:$0xff]
  %v22 = vld [vmem:[%s0] sm:$0xff]
  %v23 = vld [vmem:[%s0 + $0x8] sm:$0xff]
  %v24 = vld [vmem:[%s1] sm:$0xff]
  %v25 = vld [vmem:[%s1 + $0x8] sm:$0xff]
  %v26 = vld [vmem:[%s1 + $0x10] sm:$0xff]
  %v27 = vld [vmem:[%s1 + $0x18] sm:$0xff]
  %vm28 = vcmask 261120
  %v30 = vsel %vm28, %v22, 0
  %v33 = vsel %vm28, %v23, 0
  %35 = vmatprep.subr.mxu0 0.0
  %36 = vmatpush1.msra.mxu0 0.0
  %37 = vmatprep.subr.mxu0 0.0
  %38 = vmatpush1.msra.mxu0 0.0
  %39 = vmatprep.subr.mxu0 0.0
  %40 = vmatpush1.msra.mxu0 0.0
  %41 = vmatprep.subr.mxu0 0.0
  %42 = vmatpush1.msra.mxu0 0.0
  %43 = vmatprep.subr.mxu0 0.0
  %44 = vmatpush1.msra.mxu0 0.0
  %45 = vmatprep.subr.mxu0 0.0
  %46 = vmatpush1.msra.mxu0 0.0
  %47 = vmatprep.subr.mxu0 0.0
  %48 = vmatpush1.msra.mxu0 0.0
  %49 = vmatprep.subr.mxu0 0.0
  %50 = vmatpush1.msra.mxu0 0.0
  %51 = vmatprep.subr.mxu0 0.0
  %52 = vmatpush1.msra.mxu0 0.0
  %53 = vmatprep.subr.mxu0 0.0
  %54 = vmatpush1.msra.mxu0 0.0
  %55 = vmatprep.subr.mxu0 0.0
  %56 = vmatpush1.msra.mxu0 0.0
  %57 = vmatprep.subr.mxu0 0.0
  %58 = vmatpush1.msra.mxu0 0.0
  %59 = vmatprep.subr.mxu0 0.0
  %60 = vmatpush1.msra.mxu0 %v27
  %61 = vmatprep.subr.mxu0 0.0
  %62 = vmatpush1.msra.mxu0 %v26
  %63 = vmatprep.subr.mxu0 0.0
  %64 = vmatpush1.msra.mxu0 %v25
  %65 = vmatprep.subr.mxu0 0.0
  %66 = vmatpush1.msra.mxu0 %v24
  %67 = vmatprep.subr.mxu0 0.0
  %68 = vmatpush2.msra.mxu0 0.0
  %69 = vmatprep.subr.mxu0 0.0
  %70 = vmatpush2.msra.mxu0 0.0
  %71 = vmatprep.subr.mxu0 0.0
  %72 = vmatpush2.msra.mxu0 0.0
  %73 = vmatprep.subr.mxu0 0.0
  %74 = vmatpush2.msra.mxu0 0.0
  %75 = vmatprep.subr.mxu0 0.0
  %76 = vmatpush2.msra.mxu0 0.0
  %77 = vmatprep.subr.mxu0 0.0
  %78 = vmatpush2.msra.mxu0 0.0
  %79 = vmatprep.subr.mxu0 0.0
  %80 = vmatpush2.msra.mxu0 0.0
  %81 = vmatprep.subr.mxu0 0.0
  %82 = vmatpush2.msra.mxu0 0.0
  %83 = vmatprep.subr.mxu0 0.0
  %84 = vmatpush2.msra.mxu0 0.0
  %85 = vmatprep.subr.mxu0 0.0
  %86 = vmatpush2.msra.mxu0 0.0
  %87 = vmatprep.subr.mxu0 0.0
  %88 = vmatpush2.msra.mxu0 0.0
  %89 = vmatprep.subr.mxu0 0.0
  %90 = vmatpush2.msra.mxu0 0.0
  %91 = vmatprep.subr.mxu0 0.0
  %92 = vmatpush2.msra.mxu0 0.0
  %93 = vmatprep.subr.mxu0 0.0
  %94 = vmatpush2.msra.mxu0 0.0
  %95 = vmatprep.subr.mxu0 0.0
  %96 = vmatpush2.msra.mxu0 0.0
  %97 = vmatprep.subr.mxu0 0.0
  %98 = vmatpush2.msra.mxu0 0.0
  %99 = vmatprep.mubr.f32.mxu0 0.0
  %100 = vmatmul.mubr.f32.gmra.mxu0 %v30
  %v101 = vpop.f32.mrf.mxu0
  %v102 = vadd.f32 0.0, %v101
  %v103 = vpop.f32.mrf.mxu0
  %104 = vmatprep.mubr.f32.mxu0 0.0
  %105 = vmatmul.mubr.f32.gmra.mxu0 %v33
  %v106 = vpop.f32.mrf.mxu0
  %v107 = vadd.f32 0.0, %v106
  %v108 = vpop.f32.mrf.mxu0
  %109 = vdwg.mxu0
  %v110 = vadd.f32 %v20, %v102
  %v111 = vadd.f32 %v21, %v107
  %112 = vst [vmem:[#allocation2] sm:$0xff] %v110
  %113 = vst [vmem:[#allocation2 + $0x8] sm:$0xff] %v111
  // Predicated region
  $region18: #{combination_layer.1} parent=0 // pred_check
    %p114 = pneg %p14
  $region19: #{combination_layer.1} parent=0 // pred_check_branch
    %116 = sbr.rel (%p114) target = $region21
  $region20: #{combination_layer.1} parent=0 // pred_region
    %v117 = vld [vmem:[#allocation2] sm:$0xff]
    %v118 = vld [vmem:[#allocation2 + $0x8] sm:$0xff]
    %v119 = vld [vmem:[%s2] sm:$0x1]
    %v121 = vlaneseq
    %v122 = vshrl.u32 %v121, 7
    %v123 = vsub.s32 0, %v122
    %v124 = vrot.slane %v119, %v123
    %v126 = vadd.f32 %v117, %v124
    %v127 = vadd.f32 %v118, %v124
    %v128 = vmax.f32 %v126, 0.0
    %v129 = vmax.f32 %v127, 0.0
    %130 = vst [vmem:[%s3] sm:$0xff] %v128
    %131 = vst [vmem:[%s3 + $0x8] sm:$0xff] %v129
  $region21: #{combination_layer.1} parent=0 // pred_fallthru
    _
  // Predicated region
  $region22: #{combination_layer.1} parent=0 // pred_check
    _
  $region23: #{combination_layer.1} parent=0 // pred_check_branch
    %133 = sbr.rel (0) target = $region25
  $region24: #{combination_layer.1} parent=0 // pred_region
    _
  $region25: #{combination_layer.1} parent=0 // pred_fallthru
    _
  // Predicated region
  $region26: #{combination_layer.1} parent=0 // pred_check
    _
  $region27: #{combination_layer.1} parent=0 // pred_check_branch
    %135 = sbr.rel (0) target = $region29
  $region28: #{combination_layer.1} parent=0 // pred_region
    _
  $region29: #{combination_layer.1} parent=0 // pred_fallthru
    _

</llo_original>
